<compile_context>
chip_gen: v6e
topology: v6e:2x2x1
jax: 0.10.0
libtpu: 0.0.40
codegen_flags: <defaults>
</compile_context>

<pallas_src>
import functools
import math

import jax
import jax.numpy as jnp
from jax.experimental import pallas as pl
from jax.experimental.pallas import tpu as pltpu


def _layernorm_kernel(x_ref, alpha_ref, beta_ref, o_ref, *,
                      eps, n_feat, masked, apply_f32):
    # x_ref: (block_rows, fp); alpha/beta: (1, fp); fp is lane-dense (mult of 128
    # or the full width). n_feat is the true (unpadded) feature count.
    x = x_ref[...]
    xf = x.astype(jnp.float32)

    # Shifted one-pass statistics: subtract the first (always valid) element of
    # each row before accumulating, which kills the sum-sq cancellation problem
    # for data with large offsets while keeping a single sweep over x.
    k = xf[:, 0:1]
    d = xf - k
    if masked:
        lane = jax.lax.broadcasted_iota(jnp.int32, d.shape, 1)
        d = jnp.where(lane < n_feat, d, 0.0)

    s = jnp.sum(d, axis=-1, keepdims=True)
    sq = jnp.sum(d * d, axis=-1, keepdims=True)

    n = jnp.float32(n_feat)
    mean_d = s / n
    mean = mean_d + k
    denom = jnp.float32(max(n_feat - 1, 1))   # torch.std is unbiased (ddof=1)
    var = (sq - n * (mean_d * mean_d)) / denom
    var = jnp.maximum(var, 0.0)               # guard tiny negative residuals
    std = jnp.sqrt(var)

    # Per-row reciprocal (block_rows cheap ops). Exact to keep 1e-4 tolerance.
    inv = pl.reciprocal(std + eps, approx=False)

    if apply_f32:
        alpha = alpha_ref[...].astype(jnp.float32)
        beta = beta_ref[...].astype(jnp.float32)
        y = alpha * ((xf - mean) * inv) + beta
    else:
        # bf16 apply pass: stats are f32, but the per-element normalize/scale
        # runs in bf16 (halves VALU width + intermediate VMEM on v6e/v7x).
        dt = x.dtype
        alpha = alpha_ref[...].astype(dt)
        beta = beta_ref[...].astype(dt)
        y = alpha * ((x - mean.astype(dt)) * inv.astype(dt)) + beta
    o_ref[...] = y.astype(o_ref.dtype)


def _tpu_vmem_bytes():
    try:
        return int(pltpu.get_tpu_info().vmem_capacity_bytes)
    except Exception:
        return 128 << 20  # conservative fallback: treat as a 128 MiB part


def _choose_block_rows(rows, fp, in_itemsize, vmem_cap_bytes, target_x_bytes):
    """Pick a row-block height: aim for ~target_x_bytes of x per block, clamp to
    the VMEM budget and the (sublane-rounded) problem size, multiple of 8."""
    per_row_io = fp * in_itemsize                 # one copy of an x or y block
    per_row_vmem = 4 * per_row_io + 2 * fp * 4    # 2x-buffered in+out, f32 temps
    headroom = 4 << 20
    cap_rows = max(8, ((vmem_cap_bytes - headroom) // per_row_vmem) // 8 * 8)
    want_rows = max(8, (target_x_bytes // per_row_io) // 8 * 8)
    rows_pad8 = -(-rows // 8) * 8
    br = min(want_rows, cap_rows, rows_pad8)
    return max(8, (br // 8) * 8)


def layer_norm(x, alpha, beta, *, eps=1e-6, target_block_bytes=None):
    """x: (..., features). alpha, beta: (features,)."""
    features = x.shape[-1]
    lead_shape = x.shape[:-1]
    rows = math.prod(lead_shape) if lead_shape else 1

    # Lane-dense feature axis: pad to a multiple of 128 (masked in-kernel).
    fp = -(-features // 128) * 128
    masked = fp != features

    x2 = x.reshape(rows, features)
    a2 = alpha.reshape(1, features)
    b2 = beta.reshape(1, features)
    if masked:
        pad = fp - features
        x2 = jnp.pad(x2, ((0, 0), (0, pad)))
        a2 = jnp.pad(a2, ((0, 0), (0, pad)))  # zero alpha/beta -> padded lanes = 0
        b2 = jnp.pad(b2, ((0, 0), (0, pad)))

    # Generation-specific budgets.
    vmem_total = _tpu_vmem_bytes()
    if vmem_total <= (64 << 20):              # v7x-class (64 MiB per TC)
        vmem_cap = 48 << 20
        default_target = 4 << 20
    else:                                     # v5e / v6e (128 MiB)
        vmem_cap = 96 << 20
        default_target = 8 << 20
    tgt = int(target_block_bytes or default_target)

    itemsize = jnp.dtype(x.dtype).itemsize
    br = _choose_block_rows(rows, fp, itemsize, vmem_cap, tgt)
    grid = (pl.cdiv(rows, br),)               # partial last block handled by Pallas

    apply_f32 = x.dtype != jnp.bfloat16
    temp_bytes = br * fp * (8 if apply_f32 else 6)  # f32 temps (or f32+bf16 mix)
    need = 4 * br * fp * itemsize + temp_bytes + 4 * fp * 4 + (4 << 20)
    vmem_limit = int(min(max(need, 32 << 20), vmem_cap))

    out = pl.pallas_call(
        functools.partial(_layernorm_kernel, eps=float(eps), n_feat=features,
                          masked=masked, apply_f32=apply_f32),
        out_shape=jax.ShapeDtypeStruct((rows, fp), x.dtype),
        grid_spec=pltpu.PrefetchScalarGridSpec(
            num_scalar_prefetch=0,
            grid=grid,
            in_specs=[
                pl.BlockSpec((br, fp), lambda i: (i, 0)),
                pl.BlockSpec((1, fp), lambda i: (0, 0)),
                pl.BlockSpec((1, fp), lambda i: (0, 0)),
            ],
            out_specs=pl.BlockSpec((br, fp), lambda i: (i, 0)),
        ),
        compiler_params=pltpu.CompilerParams(
            dimension_semantics=("parallel",),
            vmem_limit_bytes=vmem_limit,
        ),
    )(x2, a2, b2)

    if masked:
        out = out[:, :features]
    return out.reshape(*lead_shape, features)


if __name__ == "__main__":
    batch, seq, features = 2, 8, 32
    eps = 1e-6

    key = jax.random.PRNGKey(0)
    x = jax.random.normal(key, (batch, seq, features), dtype=jnp.float32)

    # Deterministic params, matching nn.Parameter(torch.ones(features)).
    alpha = jnp.ones((features,), dtype=jnp.float32)
    beta = jnp.ones((features,), dtype=jnp.float32)

    y = layer_norm(x, alpha, beta, eps=eps)
    y = jax.block_until_ready(y)

    # Plain-JAX reference with identical semantics to the PyTorch module.
    mean = jnp.mean(x, axis=-1, keepdims=True)
    std = jnp.sqrt(
        jnp.sum((x - mean) ** 2, axis=-1, keepdims=True) / (features - 1)
    )
    ref = alpha * ((x - mean) / (std + eps)) + beta
    assert jnp.allclose(y, ref, atol=1e-4, rtol=1e-4), "mismatch vs reference"

    print("KERNEL_OK")
</pallas_src>

<mosaic_0001>
module attributes {stable_mosaic.version = 11 : i64} {
  func.func @_layernorm_kernel(%arg0: i32, %arg1: memref<16x128xf32, #tpu.memory_space<vmem>>, %arg2: memref<1x128xf32, #tpu.memory_space<vmem>>, %arg3: memref<1x128xf32, #tpu.memory_space<vmem>>, %arg4: memref<16x128xf32, #tpu.memory_space<vmem>>) attributes {dimension_semantics = [#tpu.dimension_semantics<parallel>], iteration_bounds = array<i64: 1>, scalar_prefetch = 0 : i64, scratch_operands = 0 : i64, tpu.core_type = #tpu.core_type<tc>, window_params = [{transform_indices = @transform_0, window_bounds = array<i64: 16, 128>}, {pipeline_mode = #tpu.pipeline_mode<synchronous>, transform_indices = @transform_1, window_bounds = array<i64: 1, 128>}, {pipeline_mode = #tpu.pipeline_mode<synchronous>, transform_indices = @transform_2, window_bounds = array<i64: 1, 128>}, {transform_indices = @transform_3, window_bounds = array<i64: 16, 128>}]} {
    %c0 = arith.constant 0 : index
    %c0_0 = arith.constant 0 : index
    %0 = vector.load %arg1[%c0, %c0_0] : memref<16x128xf32, #tpu.memory_space<vmem>>, vector<16x128xf32>
    %1 = vector.extract_strided_slice %0 {offsets = [0, 0], sizes = [16, 1], strides = [1, 1]} : vector<16x128xf32> to vector<16x1xf32>
    %2 = vector.broadcast %1 : vector<16x1xf32> to vector<16x128xf32>
    %3 = arith.subf %0, %2 : vector<16x128xf32>
    %4 = tpu.iota {dimensions = array<i32: 1>} : vector<16x128xi32>
    %c32_i32 = arith.constant 32 : i32
    %5 = vector.broadcast %c32_i32 : i32 to vector<16x128xi32>
    %6 = arith.cmpi slt, %4, %5 : vector<16x128xi32>
    %cst = arith.constant 0.000000e+00 : f32
    %7 = vector.broadcast %cst : f32 to vector<16x128xf32>
    %8 = arith.select %6, %3, %7 : vector<16x128xi1>, vector<16x128xf32>
    %cst_1 = arith.constant dense<0.000000e+00> : vector<16xf32>
    %9 = vector.multi_reduction <add>, %8, %cst_1 [1] : vector<16x128xf32> to vector<16xf32>
    %10 = vector.shape_cast %9 : vector<16xf32> to vector<16x1xf32>
    %11 = arith.mulf %8, %8 : vector<16x128xf32>
    %cst_2 = arith.constant dense<0.000000e+00> : vector<16xf32>
    %12 = vector.multi_reduction <add>, %11, %cst_2 [1] : vector<16x128xf32> to vector<16xf32>
    %13 = vector.shape_cast %12 : vector<16xf32> to vector<16x1xf32>
    %cst_3 = arith.constant 3.200000e+01 : f32
    %14 = vector.broadcast %cst_3 : f32 to vector<16x1xf32>
    %15 = arith.divf %10, %14 : vector<16x1xf32>
    %16 = arith.addf %15, %1 : vector<16x1xf32>
    %17 = arith.mulf %15, %15 : vector<16x1xf32>
    %cst_4 = arith.constant 3.200000e+01 : f32
    %18 = vector.broadcast %cst_4 : f32 to vector<16x1xf32>
    %19 = arith.mulf %18, %17 : vector<16x1xf32>
    %20 = arith.subf %13, %19 : vector<16x1xf32>
    %cst_5 = arith.constant 3.100000e+01 : f32
    %21 = vector.broadcast %cst_5 : f32 to vector<16x1xf32>
    %22 = arith.divf %20, %21 : vector<16x1xf32>
    %cst_6 = arith.constant 0.000000e+00 : f32
    %23 = vector.broadcast %cst_6 : f32 to vector<16x1xf32>
    %24 = arith.maximumf %22, %23 : vector<16x1xf32>
    %25 = math.sqrt %24 : vector<16x1xf32>
    %cst_7 = arith.constant 9.99999997E-7 : f32
    %26 = vector.broadcast %cst_7 : f32 to vector<16x1xf32>
    %27 = arith.addf %25, %26 : vector<16x1xf32>
    %28 = tpu.reciprocal %27 : vector<16x1xf32> -> vector<16x1xf32>
    %c0_8 = arith.constant 0 : index
    %c0_9 = arith.constant 0 : index
    %29 = vector.load %arg2[%c0_8, %c0_9] : memref<1x128xf32, #tpu.memory_space<vmem>>, vector<1x128xf32>
    %c0_10 = arith.constant 0 : index
    %c0_11 = arith.constant 0 : index
    %30 = vector.load %arg3[%c0_10, %c0_11] : memref<1x128xf32, #tpu.memory_space<vmem>>, vector<1x128xf32>
    %31 = vector.broadcast %16 : vector<16x1xf32> to vector<16x128xf32>
    %32 = arith.subf %0, %31 : vector<16x128xf32>
    %33 = vector.broadcast %28 : vector<16x1xf32> to vector<16x128xf32>
    %34 = arith.mulf %32, %33 : vector<16x128xf32>
    %35 = vector.broadcast %29 : vector<1x128xf32> to vector<16x128xf32>
    %36 = arith.mulf %35, %34 : vector<16x128xf32>
    %37 = vector.broadcast %30 : vector<1x128xf32> to vector<16x128xf32>
    %38 = arith.addf %36, %37 : vector<16x128xf32>
    %c0_12 = arith.constant 0 : index
    %c0_13 = arith.constant 0 : index
    %39 = vector.load %arg4[%c0_12, %c0_13] : memref<16x128xf32, #tpu.memory_space<vmem>>, vector<16x128xf32>
    tpu.vector_store %arg4[%c0_12, %c0_13], %38 {strides = array<i32>} : memref<16x128xf32, #tpu.memory_space<vmem>>, vector<16x128xf32>,
    return
  }
  func.func @transform_0(%arg0: i32) -> (i32, i32) {
    %c0_i32 = arith.constant 0 : i32
    %c0_i32_0 = arith.constant 0 : i32
    return %arg0, %c0_i32 : i32, i32
  }
  func.func @transform_1(%arg0: i32) -> (i32, i32) {
    %c0_i32 = arith.constant 0 : i32
    %c0_i32_0 = arith.constant 0 : i32
    %c0_i32_1 = arith.constant 0 : i32
    return %c0_i32, %c0_i32_0 : i32, i32
  }
  func.func @transform_2(%arg0: i32) -> (i32, i32) {
    %c0_i32 = arith.constant 0 : i32
    %c0_i32_0 = arith.constant 0 : i32
    %c0_i32_1 = arith.constant 0 : i32
    return %c0_i32, %c0_i32_0 : i32, i32
  }
  func.func @transform_3(%arg0: i32) -> (i32, i32) {
    %c0_i32 = arith.constant 0 : i32
    %c0_i32_0 = arith.constant 0 : i32
    return %arg0, %c0_i32 : i32, i32
  }
}

</mosaic_0001>

<llo_original>
// kernel: tpu_custom_call.1
$region0: #{tpu_custom_call.1}
  #allocation0 [shape = 'u32[]', space=smem, size = 0x4, offset = 0x4, fixed_abs, tag = 'smem constant byte address 0x4 - core index']
  #allocation1 [shape = 'u32[144,128]{1,0:T(1,128)}', space=vmem, size = 0x12000, scoped, tag = 'internal scratch']
  %s0 = inlined_call_operand.hbm [shape: f32[16,128], index: 0, kind: input, shape index: {}]
  %s1 = inlined_call_operand.vmem [shape: f32[1,128], index: 1, kind: input, shape index: {}]
  %s2 = inlined_call_operand.vmem [shape: f32[1,128], index: 2, kind: input, shape index: {}]
  %s3 = inlined_call_operand.hbm [shape: f32[16,128], index: 3, kind: output, shape index: {}]
  %s4 = sld [smem:[#allocation0]]
  $region26: #{tpu_custom_call.1} parent=0
    _
  %s6 = ssub.s32 1, %s4
  %s7 = scalar_select 0, %s6, %s4
  $region1: #{tpu_custom_call.1} parent=0
    #allocation2 [shape = 'u8[8192]{0}', space=vmem, size = 0x2000, scoped, tag = 'input window, operand 0, single buffered']
    #allocation3 [shape = 's32[1]{0}', space=sflag, size = 0x4, scoped, tag = 'scoped memory for tpu_custom_call.1']
    #allocation4 [shape = 's32[1]{0}', space=sflag, size = 0x4, scoped, tag = 'scoped memory for tpu_custom_call.1']
    #allocation5 [shape = 'u8[8192]{0}', space=vmem, size = 0x2000, scoped, tag = 'output window, operand 0, single buffered']
    %8 = vsyncpa [#allocation3], 0
    %9 = vsyncpa [#allocation4], 0
    // Predicated region
    $region2: #{tpu_custom_call.1} parent=1 // pred_check
      _
    $region3: #{tpu_custom_call.1} parent=1 // pred_check_branch
      %11 = sbr.rel (0) target = $region5
    $region4: #{tpu_custom_call.1} parent=1 // pred_region
      %s13 = ssub.s32 256, 256
      %14 = vsyncadd [#allocation3], %s13
      %s15 = sshll.u32 [#allocation2], 4
      %s16 = int_to_ptr.vmem [resolvable:$true] %s15
      %21 = dma.hbm_to_vmem [thread:$0]  %s0, 256, %s16, [#allocation3], 128, 128, 8
    $region5: #{tpu_custom_call.1} parent=1 // pred_fallthru
      _
    // Predicated region
    $region6: #{tpu_custom_call.1} parent=1 // pred_check
      _
    $region7: #{tpu_custom_call.1} parent=1 // pred_check_branch
      %23 = sbr.rel (0) target = $region9
    $region8: #{tpu_custom_call.1} parent=1 // pred_region
      _
    $region9: #{tpu_custom_call.1} parent=1 // pred_fallthru
      _
    // Predicated region
    $region10: #{tpu_custom_call.1} parent=1 // pred_check
      _
    $region11: #{tpu_custom_call.1} parent=1 // pred_check_branch
      %25 = sbr.rel (0) target = $region13
    $region12: #{tpu_custom_call.1} parent=1 // pred_region
      _
    $region13: #{tpu_custom_call.1} parent=1 // pred_fallthru
      _
    // Predicated region
    $region14: #{tpu_custom_call.1} parent=1 // pred_check
      _
    $region15: #{tpu_custom_call.1} parent=1 // pred_check_branch
      %27 = sbr.rel (0) target = $region17
    $region16: #{tpu_custom_call.1} parent=1 // pred_region
      %28 = dma.done [#allocation3], 256
    $region17: #{tpu_custom_call.1} parent=1 // pred_fallthru
      _
    %v29 = vld [vmem:[#allocation2] sm:$0xff]
    %v30 = vld [vmem:[#allocation2 + $0x8] sm:$0xff]
    %32 = vset.pattern.permute.xlu0 0
    %33 = vperm.xlu0 %32, %v29
    %v34 = vpop.permute.xlu0 %33
    %37 = vset.pattern.permute.xlu0 0
    %38 = vperm.xlu0 %37, %v30
    %v39 = vpop.permute.xlu0 %38
    %v41 = vsub.f32 %v29, %v34
    %v42 = vsub.f32 %v30, %v39
    %v43 = vlaneseq
    %v44 = vand.u32 %v43, 127
    %vm45 = vcmp.lt.s32.totalorder %v44, 32
    %v46 = vsel %vm45, %v41, 0.0
    %v47 = vsel %vm45, %v42, 0.0
    %48 = vadd.xlane.f32.xlu0 %v46
    %v49 = vpop.xlane.xlu0 %48
    %50 = vadd.xlane.f32.xlu0 %v47
    %v51 = vpop.xlane.xlu0 %50
    %v52 = vmul.f32 %v46, %v46
    %v53 = vmul.f32 %v47, %v47
    %54 = vadd.xlane.f32.xlu0 %v52
    %v55 = vpop.xlane.xlu0 %54
    %56 = vadd.xlane.f32.xlu0 %v53
    %v57 = vpop.xlane.xlu0 %56
    %v58 = vrcp.pop 32.0
    %v59 = vmul.f32 %v49, %v58
    %v60 = vmul.f32 %v51, %v58
    %v61 = vadd.f32 %v59, %v29
    %v62 = vadd.f32 %v60, %v30
    %v63 = vmul.f32 %v59, %v59
    %v64 = vmul.f32 %v60, %v60
    %v65 = vmul.f32 %v63, 32.0
    %v66 = vmul.f32 %v64, 32.0
    %v67 = vsub.f32 %v55, %v65
    %v68 = vsub.f32 %v57, %v66
    %v69 = vrcp.pop 31.0
    %v70 = vmul.f32 %v67, %v69
    %v71 = vmul.f32 %v68, %v69
    %v72 = vmax.f32 %v70, 0.0
    %v73 = vmax.f32 %v71, 0.0
    %v74 = vrsqrt.pop %v72
    %v75 = vmul.f32 %v72, %v74
    %vm76 = vcmp.eq.f32.partialorder %v72, inf
    %v77 = vsel %vm76, %v72, %v75
    %vm78 = vcmp.eq.f32.partialorder %v72, 0.0
    %v79 = vand.u32 %v72, 2147483648
    %v80 = vsel %vm78, %v79, %v77
    %v81 = vrsqrt.pop %v73
    %v82 = vmul.f32 %v73, %v81
    %vm83 = vcmp.eq.f32.partialorder %v73, inf
    %v84 = vsel %vm83, %v73, %v82
    %vm85 = vcmp.eq.f32.partialorder %v73, 0.0
    %v86 = vand.u32 %v73, 2147483648
    %v87 = vsel %vm85, %v86, %v84
    %v88 = vadd.f32 %v80, 1e-06
    %v89 = vadd.f32 %v87, 1e-06
    %v90 = vrcp.pop %v88
    %v91 = vrcp.pop %v89
    %v92 = vld [vmem:[%s1] sm:$0x1]
    %v93 = vld [vmem:[%s2] sm:$0x1]
    %95 = vset.pattern.permute.xlu0 0
    %96 = vperm.xlu0 %95, %v61
    %v97 = vpop.permute.xlu0 %96
    %100 = vset.pattern.permute.xlu0 0
    %101 = vperm.xlu0 %100, %v62
    %v102 = vpop.permute.xlu0 %101
    %v104 = vsub.f32 %v29, %v97
    %v105 = vsub.f32 %v30, %v102
    %v106 = vmul.f32 %v104, %v90
    %v107 = vmul.f32 %v105, %v91
    %v109 = vlaneseq
    %v110 = vshrl.u32 %v109, 7
    %v111 = vsub.s32 0, %v110
    %v112 = vrot.slane %v92, %v111
    %v114 = vmul.f32 %v112, %v106
    %v115 = vmul.f32 %v112, %v107
    %v117 = vlaneseq
    %v118 = vshrl.u32 %v117, 7
    %v119 = vsub.s32 0, %v118
    %v120 = vrot.slane %v93, %v119
    %v122 = vadd.f32 %v114, %v120
    %v123 = vadd.f32 %v115, %v120
    %124 = vst [vmem:[#allocation5] sm:$0xff] %v122
    %125 = vst [vmem:[#allocation5 + $0x8] sm:$0xff] %v123
    // Predicated region
    $region18: #{tpu_custom_call.1} parent=1 // pred_check
      _
    $region19: #{tpu_custom_call.1} parent=1 // pred_check_branch
      %127 = sbr.rel (0) target = $region21
    $region20: #{tpu_custom_call.1} parent=1 // pred_region
      %s129 = ssub.s32 256, 256
      %130 = vsyncadd [#allocation4], %s129
      %s131 = sshll.u32 [#allocation5], 4
      %s132 = int_to_ptr.vmem [resolvable:$true] %s131
      %137 = dma.vmem_to_hbm [thread:$0]  %s132, 256, %s3, [#allocation4], 128, 128, 8
    $region21: #{tpu_custom_call.1} parent=1 // pred_fallthru
      _
    // Predicated region
    $region22: #{tpu_custom_call.1} parent=1 // pred_check
      _
    $region23: #{tpu_custom_call.1} parent=1 // pred_check_branch
      %139 = sbr.rel (0) target = $region25
    $region24: #{tpu_custom_call.1} parent=1 // pred_region
      %140 = dma.done [#allocation4], 256
    $region25: #{tpu_custom_call.1} parent=1 // pred_fallthru
      _
    %141 = vsyncpa [#allocation3], 1
    %142 = vsyncpa [#allocation4], 1

</llo_original>
